<compile_context>
chip_gen: v6e
topology: v6e:2x2x1
jax: 0.10.0
libtpu: 0.0.40
codegen_flags: <defaults>
</compile_context>

<pallas_src>
import jax
import jax.numpy as jnp
from jax.experimental import pallas as pl
from jax.experimental.pallas import tpu as pltpu


def _focus_conv_kernel(x_ref, w_ref, bias_ref, o_ref):
    # x_ref   : (1, K, TS)  activation tile (K = 4*C in-channels, TS spatial cols)
    # w_ref   : (N, K)      1x1-conv weight with BN scale folded in (resident)
    # bias_ref: (N, 1)      BN (eval) bias (resident)
    # o_ref   : (1, N, TS)  output tile (NCHW-flattened)
    #
    # Note: jnp.dot with f32 operands uses DEFAULT MXU precision (bf16 passes),
    # matching the pure-JAX reference; set precision=HIGHEST if bit-accurate f32
    # is ever required.
    acc = jnp.dot(w_ref[...], x_ref[0], preferred_element_type=jnp.float32)  # (N, TS)
    y = acc + bias_ref[...]                         # (N, 1) broadcasts across lanes
    o_ref[0] = (y * jax.nn.sigmoid(y)).astype(o_ref.dtype)


def focus_pallas(x, w, bn_gamma, bn_beta, bn_mean, bn_var, eps=1e-5,
                 block_cols=16384, io_dtype=None):
    """x: (B, C, H, W) NCHW float32.  Returns (B, c2, H//2, W//2) NCHW.

    io_dtype: optional storage dtype (e.g. jnp.bfloat16) for the activation,
    weight and output; accumulation/epilogue stay f32.
    """
    B, C, H, W = x.shape
    c2 = w.shape[0]
    assert w.shape == (c2, 4 * C, 1, 1), "expected 1x1 conv weight (c2, 4C, 1, 1)"
    assert H % 2 == 0 and W % 2 == 0
    H2, W2 = H // 2, W // 2
    K, N = 4 * C, c2
    S = H2 * W2

    store_dtype = x.dtype if io_dtype is None else jnp.dtype(io_dtype)

    # ---- space-to-depth (matches torch.cat order exactly), NCHW preserved ----
    # With allow_input_fusion this producer can fuse into the kernel's input DMA.
    xs = jnp.concatenate(
        [
            x[..., ::2, ::2],    # H even, W even
            x[..., 1::2, ::2],   # H odd,  W even
            x[..., ::2, 1::2],   # H even, W odd
            x[..., 1::2, 1::2],  # H odd,  W odd
        ],
        axis=1,
    )                                            # (B, 4C, H2, W2)
    x_mat = xs.reshape(B, K, S).astype(store_dtype)   # pure reshape, no transpose

    # ---- fuse eval-mode BatchNorm into the weight (scale) and a bias ----
    inv_std = 1.0 / jnp.sqrt(bn_var + eps)
    scale = (bn_gamma * inv_std).astype(jnp.float32)                        # (N,)
    bias = (bn_beta - bn_mean * bn_gamma * inv_std).astype(jnp.float32)     # (N,)
    bias = bias.reshape(N, 1)
    w_fused = (w[:, :, 0, 0].astype(jnp.float32) * scale[:, None]).astype(store_dtype)  # (N, K)

    # ---- spatial tiling (lane axis); ragged last block, no padding copy ----
    if S <= block_cols:
        TS = S                                    # single full-dim block (always legal)
    else:
        TS = max(128, block_cols - block_cols % 128)   # lane-dense multiple of 128
    grid = (B, pl.cdiv(S, TS))

    itemsize = jnp.dtype(store_dtype).itemsize
    cost = pl.CostEstimate(
        flops=2 * B * S * K * N,
        transcendentals=B * S * N,                       # sigmoid in the epilogue
        bytes_accessed=(B * K * S + K * N) * itemsize + N * 4 + B * N * S * itemsize,
    )

    out = pl.pallas_call(
        _focus_conv_kernel,
        out_shape=jax.ShapeDtypeStruct((B, N, S), store_dtype),
        grid_spec=pltpu.PrefetchScalarGridSpec(
            num_scalar_prefetch=0,
            grid=grid,
            in_specs=[
                pl.BlockSpec((1, K, TS), lambda b, s: (b, 0, s)),  # activation, pipelined
                pl.BlockSpec((N, K), lambda b, s: (0, 0)),         # weight, resident
                pl.BlockSpec((N, 1), lambda b, s: (0, 0)),         # bias, resident
            ],
            out_specs=pl.BlockSpec((1, N, TS), lambda b, s: (b, 0, s)),
        ),
        compiler_params=pltpu.CompilerParams(
            dimension_semantics=("parallel", "parallel"),  # independent tiles
            vmem_limit_bytes=48 * 1024 * 1024,             # >> footprint; headroom on v7x (64 MiB VMEM)
            allow_input_fusion=[True, False, False],       # fuse space-to-depth into input DMA
        ),
        cost_estimate=cost,
    )(x_mat, w_fused, bias)

    # (B, N, S) -> (B, N, H2, W2): pure reshape, already NCHW.
    return out.reshape(B, N, H2, W2)


def _reference(x, w, bn_gamma, bn_beta, bn_mean, bn_var, eps=1e-5):
    """Pure-JAX reference for the same (eval-mode BN) forward."""
    xs = jnp.concatenate(
        [x[..., ::2, ::2], x[..., 1::2, ::2], x[..., ::2, 1::2], x[..., 1::2, 1::2]],
        axis=1,
    )
    y = jnp.einsum("bchw,oc->bohw", xs, w[:, :, 0, 0])
    inv_std = 1.0 / jnp.sqrt(bn_var + eps)
    y = (y - bn_mean[None, :, None, None]) * inv_std[None, :, None, None]
    y = y * bn_gamma[None, :, None, None] + bn_beta[None, :, None, None]
    return y * jax.nn.sigmoid(y)


def _run_case(key, B, C, H, W, c2, block_cols=16384, io_dtype=None,
              atol=1e-4, rtol=1e-4):
    kx, kw, kg, kb, km, kv = jax.random.split(key, 6)
    x = jax.random.normal(kx, (B, C, H, W), dtype=jnp.float32)
    w = jax.random.normal(kw, (c2, 4 * C, 1, 1), dtype=jnp.float32) * 0.1
    bn_gamma = 1.0 + 0.1 * jax.random.normal(kg, (c2,), dtype=jnp.float32)
    bn_beta = 0.1 * jax.random.normal(kb, (c2,), dtype=jnp.float32)
    bn_mean = 0.05 * jax.random.normal(km, (c2,), dtype=jnp.float32)
    bn_var = jnp.abs(1.0 + 0.1 * jax.random.normal(kv, (c2,), dtype=jnp.float32))

    out = focus_pallas(x, w, bn_gamma, bn_beta, bn_mean, bn_var,
                       block_cols=block_cols, io_dtype=io_dtype)
    out = jax.block_until_ready(out)
    ref = _reference(x, w, bn_gamma, bn_beta, bn_mean, bn_var)

    assert out.shape == (B, c2, H // 2, W // 2), out.shape
    assert jnp.allclose(out.astype(jnp.float32), ref, atol=atol, rtol=rtol), \
        "mismatch vs reference"


if __name__ == "__main__":
    key = jax.random.PRNGKey(0)
    k1, k2, k3 = jax.random.split(key, 3)

    # Small case matching the module spec sizes (B=2, C=4, spatial=16, c2=32).
    _run_case(k1, B=2, C=4, H=16, W=16, c2=32)

    # Larger case exercising multiple spatial tiles plus a ragged last block
    # (S = 90*50 = 4500, TS = 1024 -> 5 tiles, last one partial, no padding).
    _run_case(k2, B=1, C=3, H=180, W=100, c2=32, block_cols=1024)

    # bf16 storage path (accumulation and bias/SiLU epilogue stay f32).
    _run_case(k3, B=2, C=4, H=32, W=32, c2=32, io_dtype=jnp.bfloat16,
              atol=0.1, rtol=0.1)

    print("KERNEL_OK")
</pallas_src>

<mosaic_0001>
module attributes {stable_mosaic.version = 11 : i64} {
  func.func @_focus_conv_kernel(%arg0: i32, %arg1: i32, %arg2: memref<1x16x64xf32, #tpu.memory_space<vmem>>, %arg3: memref<32x16xf32, #tpu.memory_space<vmem>>, %arg4: memref<32x1xf32, #tpu.memory_space<vmem>>, %arg5: memref<1x32x64xf32, #tpu.memory_space<vmem>>) attributes {dimension_semantics = [#tpu.dimension_semantics<parallel>, #tpu.dimension_semantics<parallel>], iteration_bounds = array<i64: 2, 1>, scalar_prefetch = 0 : i64, scratch_operands = 0 : i64, tpu.core_type = #tpu.core_type<tc>, window_params = [{transform_indices = @transform_0, window_bounds = array<i64: 1, 16, 64>}, {pipeline_mode = #tpu.pipeline_mode<synchronous>, transform_indices = @transform_1, window_bounds = array<i64: 32, 16>}, {pipeline_mode = #tpu.pipeline_mode<synchronous>, transform_indices = @transform_2, window_bounds = array<i64: 32, 1>}, {transform_indices = @transform_3, window_bounds = array<i64: 1, 32, 64>}]} {
    %c0 = arith.constant 0 : index
    %c0_0 = arith.constant 0 : index
    %0 = vector.load %arg3[%c0, %c0_0] : memref<32x16xf32, #tpu.memory_space<vmem>>, vector<32x16xf32>
    %c0_1 = arith.constant 0 : index
    %c0_2 = arith.constant 0 : index
    %c0_3 = arith.constant 0 : index
    %1 = vector.load %arg2[%c0_1, %c0_2, %c0_3] : memref<1x16x64xf32, #tpu.memory_space<vmem>>, vector<1x16x64xf32>
    %2 = vector.shape_cast %1 : vector<1x16x64xf32> to vector<16x64xf32>
    %cst = arith.constant dense<0.000000e+00> : vector<32x64xf32>
    %3 = tpu.matmul %0, %2, %cst {dimension_numbers = #tpu.dot_dimension_numbers<[1], [0], [0], [1], [0, 0, 1, 1], [], []>} : vector<32x16xf32>, vector<16x64xf32>, vector<32x64xf32> -> vector<32x64xf32>
    %c0_4 = arith.constant 0 : index
    %c0_5 = arith.constant 0 : index
    %4 = vector.load %arg4[%c0_4, %c0_5] : memref<32x1xf32, #tpu.memory_space<vmem>>, vector<32x1xf32>
    %5 = vector.broadcast %4 : vector<32x1xf32> to vector<32x64xf32>
    %6 = arith.addf %3, %5 : vector<32x64xf32>
    %7 = arith.negf %6 : vector<32x64xf32>
    %8 = math.exp %7 : vector<32x64xf32>
    %cst_6 = arith.constant 1.000000e+00 : f32
    %9 = vector.broadcast %cst_6 : f32 to vector<32x64xf32>
    %10 = arith.addf %9, %8 : vector<32x64xf32>
    %11 = arith.divf %9, %10 : vector<32x64xf32>
    %12 = arith.mulf %6, %11 : vector<32x64xf32>
    %c0_7 = arith.constant 0 : index
    %c0_8 = arith.constant 0 : index
    %c0_9 = arith.constant 0 : index
    %13 = vector.load %arg5[%c0_7, %c0_8, %c0_9] : memref<1x32x64xf32, #tpu.memory_space<vmem>>, vector<1x32x64xf32>
    %14 = vector.shape_cast %13 : vector<1x32x64xf32> to vector<32x64xf32>
    %15 = vector.shape_cast %12 : vector<32x64xf32> to vector<1x32x64xf32>
    tpu.vector_store %arg5[%c0_7, %c0_8, %c0_9], %15 {strides = array<i32>} : memref<1x32x64xf32, #tpu.memory_space<vmem>>, vector<1x32x64xf32>,
    return
  }
  func.func @transform_0(%arg0: i32, %arg1: i32) -> (i32, i32, i32) {
    %c0_i32 = arith.constant 0 : i32
    %c0_i32_0 = arith.constant 0 : i32
    return %arg0, %c0_i32, %arg1 : i32, i32, i32
  }
  func.func @transform_1(%arg0: i32, %arg1: i32) -> (i32, i32) {
    %c0_i32 = arith.constant 0 : i32
    %c0_i32_0 = arith.constant 0 : i32
    %c0_i32_1 = arith.constant 0 : i32
    return %c0_i32, %c0_i32_0 : i32, i32
  }
  func.func @transform_2(%arg0: i32, %arg1: i32) -> (i32, i32) {
    %c0_i32 = arith.constant 0 : i32
    %c0_i32_0 = arith.constant 0 : i32
    %c0_i32_1 = arith.constant 0 : i32
    return %c0_i32, %c0_i32_0 : i32, i32
  }
  func.func @transform_3(%arg0: i32, %arg1: i32) -> (i32, i32, i32) {
    %c0_i32 = arith.constant 0 : i32
    %c0_i32_0 = arith.constant 0 : i32
    return %arg0, %c0_i32, %arg1 : i32, i32, i32
  }
}

</mosaic_0001>

<llo_original>
// kernel: tpu_custom_call.1
$region0: #{tpu_custom_call.1}
  #allocation0 [shape = 'u32[]', space=smem, size = 0x4, offset = 0x4, fixed_abs, tag = 'smem constant byte address 0x4 - core index']
  #allocation1 [shape = 'u32[144,128]{1,0:T(1,128)}', space=vmem, size = 0x12000, scoped, tag = 'internal scratch']
  %s0 = inlined_call_operand.vmem [shape: f32[2,16,64], index: 0, kind: input, shape index: {}]
  %s1 = inlined_call_operand.vmem [shape: f32[32,16], index: 1, kind: input, shape index: {}]
  %s2 = inlined_call_operand.vmem [shape: f32[32,1], index: 2, kind: input, shape index: {}]
  %s3 = inlined_call_operand.hbm [shape: f32[2,32,64], index: 3, kind: output, shape index: {}]
  %s4 = sld [smem:[#allocation0]]
  $region45: #{tpu_custom_call.1} parent=0
    _
  %s6 = ssub.s32 1, %s4
  %s7 = scalar_select 0, %s6, %s4
  $region1: #{tpu_custom_call.1} parent=0
    #allocation2 [shape = 'u8[32768]{0}', space=vmem, size = 0x8000, scoped, tag = 'output window, operand 0']
    #allocation3 [shape = 's32[2]{0}', space=sflag, size = 0x8, scoped, tag = 'scoped memory for tpu_custom_call.1']
    %8 = vsyncpa [#allocation3], 0
    %s9 = scalar_lea.sflag [#allocation3], 1
    %10 = vsyncpa %s9, 0
    loop: start=0, step=1, limit=4
    $region2: #{tpu_custom_call.1} parent=1 // loop_pre_header
      _
    $region3: #{tpu_custom_call.1} parent=1 // loop_header
      %s12 = sphi 0, %s16
      %p13 = scmp.ge.s32.totalorder %s12, 4
      %s19 = sphi 0, %s31
      %s20 = sphi 0, %s27
      %s21 = sphi 0, %s19
      %s22 = sphi 0, %s20
      %s23 = sphi 0, %s21
      %s24 = sphi 0, %s22
      %s36 = sphi 0, %s38
      %s39 = sphi 0, %s36
      %s40 = sphi 0, %s39
      %s56 = sphi 0, %s40
      %s60 = sphi 0, %s60
      %s62 = sphi 0, %s60
      %s63 = sphi 0, %s62
      %s77 = sphi 0, %s63
      %s81 = sphi 0, %s81
      %s83 = sphi 0, %s81
      %s84 = sphi 0, %s83
      %s98 = sphi 0, %s84
      %s106 = sphi 0, %s108
      %s109 = sphi 0, %s106
      %s110 = sphi 0, %s109
      %s126 = sphi 0, %s110
    $region4: #{tpu_custom_call.1} parent=1 // loop_header_branch
      %15 = sbr.rel (%p13) target = $region8
    $region5: #{tpu_custom_call.1} parent=1 // loop_body
      %s17 = ssub.s32 %s12, 1
      %s18 = ssub.s32 %s12, 2
      %s25 = sadd.s32 1, %s20
      %p26 = scmp.ge.s32.totalorder %s25, 1
      %s27 = scalar_select %p26, 0, %s25
      %s28 = sadd.s32 1, %s19
      %s29 = scalar_select %p26, %s28, %s19
      %p30 = scmp.ge.s32.totalorder %s29, 2
      %s31 = scalar_select %p30, 0, %s29
      %s32 = ssub.s32 %s19, %s31
      %s33 = ssub.s32 %s20, %s27
      %s34 = sor.u32 %s32, %s33
      %p35 = scmp.eq.s32.totalorder %s34, 0
      %s37 = sadd.s32 %s36, 1
      %s38 = scalar_select %p35, %s36, %s37
      %p41 = pneg %p35
      %p42 = scmp.eq.s32.totalorder %s12, 1
      %p43 = por %p41, %p42
      %p44 = scmp.ne.s32.totalorder %s36, %s39
      %p45 = scmp.eq.s32.totalorder %s12, 0
      %p46 = por %p44, %p45
      %p47 = scmp.ne.s32.totalorder %s36, %s39
      %p48 = scmp.eq.s32.totalorder %s17, 1
      %p49 = por %p47, %p48
      %p50 = scmp.ne.s32.totalorder %s39, %s40
      %p51 = scmp.eq.s32.totalorder %s17, 0
      %p52 = por %p50, %p51
      %p53 = scmp.ne.s32.totalorder %s39, %s40
      %p54 = scmp.eq.s32.totalorder %s18, 1
      %p55 = por %p53, %p54
      %p57 = scmp.ne.s32.totalorder %s40, %s56
      %p58 = scmp.eq.s32.totalorder %s18, 0
      %p59 = por %p57, %p58
      %s61 = sadd.s32 %s60, 1
      %p64 = scmp.eq.s32.totalorder %s12, 1
      %p65 = scmp.ne.s32.totalorder %s60, %s62
      %p66 = scmp.eq.s32.totalorder %s12, 0
      %p67 = por %p65, %p66
      %p68 = scmp.ne.s32.totalorder %s60, %s62
      %p69 = scmp.eq.s32.totalorder %s17, 1
      %p70 = por %p68, %p69
      %p71 = scmp.ne.s32.totalorder %s62, %s63
      %p72 = scmp.eq.s32.totalorder %s17, 0
      %p73 = por %p71, %p72
      %p74 = scmp.ne.s32.totalorder %s62, %s63
      %p75 = scmp.eq.s32.totalorder %s18, 1
      %p76 = por %p74, %p75
      %p78 = scmp.ne.s32.totalorder %s63, %s77
      %p79 = scmp.eq.s32.totalorder %s18, 0
      %p80 = por %p78, %p79
      %s82 = sadd.s32 %s81, 1
      %p85 = scmp.eq.s32.totalorder %s12, 1
      %p86 = scmp.ne.s32.totalorder %s81, %s83
      %p87 = scmp.eq.s32.totalorder %s12, 0
      %p88 = por %p86, %p87
      %p89 = scmp.ne.s32.totalorder %s81, %s83
      %p90 = scmp.eq.s32.totalorder %s17, 1
      %p91 = por %p89, %p90
      %p92 = scmp.ne.s32.totalorder %s83, %s84
      %p93 = scmp.eq.s32.totalorder %s17, 0
      %p94 = por %p92, %p93
      %p95 = scmp.ne.s32.totalorder %s83, %s84
      %p96 = scmp.eq.s32.totalorder %s18, 1
      %p97 = por %p95, %p96
      %p99 = scmp.ne.s32.totalorder %s84, %s98
      %p100 = scmp.eq.s32.totalorder %s18, 0
      %p101 = por %p99, %p100
      %s102 = ssub.s32 %s19, %s31
      %s103 = ssub.s32 %s20, %s27
      %s104 = sor.u32 %s102, %s103
      %p105 = scmp.eq.s32.totalorder %s104, 0
      %s107 = sadd.s32 %s106, 1
      %s108 = scalar_select %p105, %s106, %s107
      %p111 = pneg %p105
      %p112 = scmp.eq.s32.totalorder %s12, 1
      %p113 = por %p111, %p112
      %p114 = scmp.ne.s32.totalorder %s106, %s109
      %p115 = scmp.eq.s32.totalorder %s12, 0
      %p116 = por %p114, %p115
      %p117 = scmp.ne.s32.totalorder %s106, %s109
      %p118 = scmp.eq.s32.totalorder %s17, 1
      %p119 = por %p117, %p118
      %p120 = scmp.ne.s32.totalorder %s109, %s110
      %p121 = scmp.eq.s32.totalorder %s17, 0
      %p122 = por %p120, %p121
      %p123 = scmp.ne.s32.totalorder %s109, %s110
      %p124 = scmp.eq.s32.totalorder %s18, 1
      %p125 = por %p123, %p124
      %p127 = scmp.ne.s32.totalorder %s110, %s126
      %p128 = scmp.eq.s32.totalorder %s18, 0
      %p129 = por %p127, %p128
      %p130 = scmp.le.s32.totalorder 1, %s12
      %p131 = scmp.lt.s32.totalorder %s12, 3
      %p132 = pnand %p130, %p131
      %p133 = pneg %p132
      // Predicated region
      $region9: #{tpu_custom_call.1} parent=5 // pred_check
        _
      $region10: #{tpu_custom_call.1} parent=5 // pred_check_branch
        %135 = sbr.rel (%p132) target = $region12
      $region11: #{tpu_custom_call.1} parent=5 // pred_region
        %s136 = ssub.s32 %s12, 1
        // Predicated region
        $region13: #{tpu_custom_call.1} parent=11 // pred_check
          %p137 = pneg %p73
        $region14: #{tpu_custom_call.1} parent=11 // pred_check_branch
          %139 = sbr.rel (%p137) target = $region16
        $region15: #{tpu_custom_call.1} parent=11 // pred_region
          _
        $region16: #{tpu_custom_call.1} parent=11 // pred_fallthru
          _
        // Predicated region
        $region17: #{tpu_custom_call.1} parent=11 // pred_check
          %p140 = pneg %p94
        $region18: #{tpu_custom_call.1} parent=11 // pred_check_branch
          %142 = sbr.rel (%p140) target = $region20
        $region19: #{tpu_custom_call.1} parent=11 // pred_region
          _
        $region20: #{tpu_custom_call.1} parent=11 // pred_fallthru
          _
      $region12: #{tpu_custom_call.1} parent=5 // pred_fallthru
        _
      %p143 = scmp.lt.s32.totalorder %s12, 2
      // Predicated region
      $region21: #{tpu_custom_call.1} parent=5 // pred_check
        %p144 = pneg %p143
      $region22: #{tpu_custom_call.1} parent=5 // pred_check_branch
        %146 = sbr.rel (%p144) target = $region24
      $region23: #{tpu_custom_call.1} parent=5 // pred_region
        // Predicated region
        $region25: #{tpu_custom_call.1} parent=23 // pred_check
          %p147 = pneg %p46
        $region26: #{tpu_custom_call.1} parent=23 // pred_check_branch
          %149 = sbr.rel (%p147) target = $region28
        $region27: #{tpu_custom_call.1} parent=23 // pred_region
          %p150 = scmp.lt.s32.totalorder %s19, 1
          %s151 = scalar_select %p150, %s19, 1
          %p152 = scmp.lt.s32.totalorder %s20, 0
          %s153 = scalar_select %p152, %s20, 0
          %s154 = smul.addr %s151, 2
          %s155 = sadd.s32 %s153, %s154
          %s156 = smul.addr %s155, 8
          %s157 = scalar_lea.vmem %s0, %s156
        $region28: #{tpu_custom_call.1} parent=23 // pred_fallthru
          _
      $region24: #{tpu_custom_call.1} parent=5 // pred_fallthru
        _
      %p158 = scmp.le.s32.totalorder 1, %s12
      %p159 = scmp.lt.s32.totalorder %s12, 3
      %p160 = pnand %p158, %p159
      %p161 = pneg %p160
      // Predicated region
      $region29: #{tpu_custom_call.1} parent=5 // pred_check
        _
      $region30: #{tpu_custom_call.1} parent=5 // pred_check_branch
        %163 = sbr.rel (%p160) target = $region32
      $region31: #{tpu_custom_call.1} parent=5 // pred_region
        %s164 = ssub.s32 %s12, 1
        %p165 = scmp.lt.s32.totalorder %s21, 1
        %s166 = scalar_select %p165, %s21, 1
        %p167 = scmp.lt.s32.totalorder %s22, 0
        %s168 = scalar_select %p167, %s22, 0
        %s169 = smul.addr %s166, 2
        %s170 = sadd.s32 %s168, %s169
        %s171 = smul.addr %s170, 8
        %s172 = scalar_lea.vmem %s0, %s171
        %p173 = pneg %p52
        %p174 = pneg %p49
        %p175 = pneg %p73
        %p176 = pneg %p70
        %p177 = pneg %p94
        %p178 = pneg %p91
        %p179 = pneg %p122
        %p180 = pneg %p119
        %s181 = sand.u32 %s109, 1
        %s182 = scalar_lea.sflag [#allocation3], %s181
        %s183 = sand.u32 %s109, 1
        %s184 = smul.addr %s183, 32
        %s185 = scalar_lea.vmem [#allocation2], %s184
        %p186 = scmp.lt.s32.totalorder %s21, 1
        %s187 = scalar_select %p186, %s21, 1
        %p188 = scmp.lt.s32.totalorder %s22, 0
        %s189 = scalar_select %p188, %s22, 0
        %s190 = smul.addr %s187, 2
        %s191 = sadd.s32 %s189, %s190
        %s192 = smul.addr %s191, 8
        %s193 = scalar_lea.vmem %s0, %s192
        %v194 = vld [vmem:[%s1] sm:$0xff]
        %v195 = vld [vmem:[%s1 + $0x8] sm:$0xff]
        %v196 = vld [vmem:[%s1 + $0x10] sm:$0xff]
        %v197 = vld [vmem:[%s1 + $0x18] sm:$0xff]
        %v198 = vld [vmem:[%s193] sm:$0xff]
        %v199 = vld [vmem:[%s193 + $0x8] sm:$0xff]
        %v200 = vld [vmem:[%s2] sm:$0xff]
        %v201 = vld [vmem:[%s2 + $0x8] sm:$0xff]
        %v202 = vld [vmem:[%s2 + $0x10] sm:$0xff]
        %v203 = vld [vmem:[%s2 + $0x18] sm:$0xff]
        %205 = vset.pattern.permute.xlu0 0
        %206 = vperm.xlu0 %205, %v200
        %v207 = vpop.permute.xlu0 %206
        %210 = vset.pattern.permute.xlu0 0
        %211 = vperm.xlu0 %210, %v201
        %v212 = vpop.permute.xlu0 %211
        %215 = vset.pattern.permute.xlu0 0
        %216 = vperm.xlu0 %215, %v202
        %v217 = vpop.permute.xlu0 %216
        %220 = vset.pattern.permute.xlu0 0
        %221 = vperm.xlu0 %220, %v203
        %v222 = vpop.permute.xlu0 %221
        %vm224 = vcmask 130048
        %v226 = vsel %vm224, %v194, 0
        %v229 = vsel %vm224, %v195, 0
        %v232 = vsel %vm224, %v196, 0
        %v235 = vsel %vm224, %v197, 0
        %237 = vmatprep.subr.mxu0 0.0
        %238 = vmatpush1.msra.mxu0 0.0
        %239 = vmatprep.subr.mxu0 0.0
        %240 = vmatpush1.msra.mxu0 0.0
        %241 = vmatprep.subr.mxu0 0.0
        %242 = vmatpush1.msra.mxu0 0.0
        %243 = vmatprep.subr.mxu0 0.0
        %244 = vmatpush1.msra.mxu0 0.0
        %245 = vmatprep.subr.mxu0 0.0
        %246 = vmatpush1.msra.mxu0 0.0
        %247 = vmatprep.subr.mxu0 0.0
        %248 = vmatpush1.msra.mxu0 0.0
        %249 = vmatprep.subr.mxu0 0.0
        %250 = vmatpush1.msra.mxu0 0.0
        %251 = vmatprep.subr.mxu0 0.0
        %252 = vmatpush1.msra.mxu0 0.0
        %253 = vmatprep.subr.mxu0 0.0
        %254 = vmatpush1.msra.mxu0 0.0
        %255 = vmatprep.subr.mxu0 0.0
        %256 = vmatpush1.msra.mxu0 0.0
        %257 = vmatprep.subr.mxu0 0.0
        %258 = vmatpush1.msra.mxu0 0.0
        %259 = vmatprep.subr.mxu0 0.0
        %260 = vmatpush1.msra.mxu0 0.0
        %261 = vmatprep.subr.mxu0 0.0
        %262 = vmatpush1.msra.mxu0 0.0
        %263 = vmatprep.subr.mxu0 0.0
        %264 = vmatpush1.msra.mxu0 0.0
        %265 = vmatprep.subr.mxu0 0.0
        %266 = vmatpush1.msra.mxu0 %v199
        %267 = vmatprep.subr.mxu0 0.0
        %268 = vmatpush1.msra.mxu0 %v198
        %269 = vmatprep.subr.mxu0 0.0
        %270 = vmatpush2.msra.mxu0 0.0
        %271 = vmatprep.subr.mxu0 0.0
        %272 = vmatpush2.msra.mxu0 0.0
        %273 = vmatprep.subr.mxu0 0.0
        %274 = vmatpush2.msra.mxu0 0.0
        %275 = vmatprep.subr.mxu0 0.0
        %276 = vmatpush2.msra.mxu0 0.0
        %277 = vmatprep.subr.mxu0 0.0
        %278 = vmatpush2.msra.mxu0 0.0
        %279 = vmatprep.subr.mxu0 0.0
        %280 = vmatpush2.msra.mxu0 0.0
        %281 = vmatprep.subr.mxu0 0.0
        %282 = vmatpush2.msra.mxu0 0.0
        %283 = vmatprep.subr.mxu0 0.0
        %284 = vmatpush2.msra.mxu0 0.0
        %285 = vmatprep.subr.mxu0 0.0
        %286 = vmatpush2.msra.mxu0 0.0
        %287 = vmatprep.subr.mxu0 0.0
        %288 = vmatpush2.msra.mxu0 0.0
        %289 = vmatprep.subr.mxu0 0.0
        %290 = vmatpush2.msra.mxu0 0.0
        %291 = vmatprep.subr.mxu0 0.0
        %292 = vmatpush2.msra.mxu0 0.0
        %293 = vmatprep.subr.mxu0 0.0
        %294 = vmatpush2.msra.mxu0 0.0
        %295 = vmatprep.subr.mxu0 0.0
        %296 = vmatpush2.msra.mxu0 0.0
        %297 = vmatprep.subr.mxu0 0.0
        %298 = vmatpush2.msra.mxu0 0.0
        %299 = vmatprep.subr.mxu0 0.0
        %300 = vmatpush2.msra.mxu0 0.0
        %301 = vmatprep.mubr.f32.mxu0 0.0
        %302 = vmatmul.mubr.f32.gmra.mxu0 %v226
        %v303 = vpop.f32.mrf.mxu0
        %v304 = vadd.f32 %v207, %v303
        %v305 = vpop.f32.mrf.mxu0
        %306 = vmatprep.mubr.f32.mxu0 0.0
        %307 = vmatmul.mubr.f32.gmra.mxu0 %v229
        %v308 = vpop.f32.mrf.mxu0
        %v309 = vadd.f32 %v212, %v308
        %v310 = vpop.f32.mrf.mxu0
        %311 = vmatprep.mubr.f32.mxu0 0.0
        %312 = vmatmul.mubr.f32.gmra.mxu0 %v232
        %v313 = vpop.f32.mrf.mxu0
        %v314 = vadd.f32 %v217, %v313
        %v315 = vpop.f32.mrf.mxu0
        %316 = vmatprep.mubr.f32.mxu0 0.0
        %317 = vmatmul.mubr.f32.gmra.mxu0 %v235
        %v318 = vpop.f32.mrf.mxu0
        %v319 = vadd.f32 %v222, %v318
        %v320 = vpop.f32.mrf.mxu0
        %321 = vdwg.mxu0
        %v322 = vxor.u32 %v304, 2147483648
        %v323 = vxor.u32 %v309, 2147483648
        %v324 = vxor.u32 %v314, 2147483648
        %v325 = vxor.u32 %v319, 2147483648
        %v326 = vmul.f32 %v322, 1.442695
        %v327 = vpow.pop %v326
        %v328 = vmul.f32 %v323, 1.442695
        %v329 = vpow.pop %v328
        %v330 = vmul.f32 %v324, 1.442695
        %v331 = vpow.pop %v330
        %v332 = vmul.f32 %v325, 1.442695
        %v333 = vpow.pop %v332
        %v334 = vadd.f32 %v327, 1.0
        %v335 = vadd.f32 %v329, 1.0
        %v336 = vadd.f32 %v331, 1.0
        %v337 = vadd.f32 %v333, 1.0
        %v338 = vrcp.pop %v334
        %v339 = vmul.f32 1.0, %v338
        %v340 = vrcp.pop %v335
        %v341 = vmul.f32 1.0, %v340
        %v342 = vrcp.pop %v336
        %v343 = vmul.f32 1.0, %v342
        %v344 = vrcp.pop %v337
        %v345 = vmul.f32 1.0, %v344
        %v346 = vmul.f32 %v304, %v339
        %v347 = vmul.f32 %v309, %v341
        %v348 = vmul.f32 %v314, %v343
        %v349 = vmul.f32 %v319, %v345
        %vm350 = vcmask 523264
        %351 = vst.msk [vmem:[%s185] sm:$0xff] %vm350, %v346
        %352 = vst.msk [vmem:[%s185 + $0x8] sm:$0xff] %vm350, %v347
        %353 = vst.msk [vmem:[%s185 + $0x10] sm:$0xff] %vm350, %v348
        %354 = vst.msk [vmem:[%s185 + $0x18] sm:$0xff] %vm350, %v349
        %s355 = sand.u32 %s109, 1
        %s356 = scalar_lea.sflag [#allocation3], %s355
        %s357 = sand.u32 %s109, 1
        %s358 = smul.addr %s357, 32
        %s359 = scalar_lea.vmem [#allocation2], %s358
        // Predicated region
        $region33: #{tpu_custom_call.1} parent=31 // pred_check
          %p360 = pneg %p119
        $region34: #{tpu_custom_call.1} parent=31 // pred_check_branch
          %362 = sbr.rel (%p360) target = $region36
        $region35: #{tpu_custom_call.1} parent=31 // pred_region
          %s364 = ssub.s32 512, 512
          %365 = vsyncadd %s356, %s364
          %s366 = smul.addr %s21, 4
          %s367 = sadd.s32 %s22, %s366
          %s368 = smul.addr %s367, 128
          %s369 = scalar_lea.hbm %s3, %s368
          %s370 = sshll.u32 %s359, 4
          %s371 = int_to_ptr.vmem [resolvable:$true] %s370
          %376 = dma.vmem_to_hbm [thread:$0]  %s371, 512, %s369, %s356, 128, 128, 8
        $region36: #{tpu_custom_call.1} parent=31 // pred_fallthru
          _
      $region32: #{tpu_custom_call.1} parent=5 // pred_fallthru
        _
      %p377 = scmp.le.s32.totalorder 2, %s12
      // Predicated region
      $region37: #{tpu_custom_call.1} parent=5 // pred_check
        %p378 = pneg %p377
      $region38: #{tpu_custom_call.1} parent=5 // pred_check_branch
        %380 = sbr.rel (%p378) target = $region40
      $region39: #{tpu_custom_call.1} parent=5 // pred_region
        %s381 = ssub.s32 %s12, 2
        // Predicated region
        $region41: #{tpu_custom_call.1} parent=39 // pred_check
          %p382 = pneg %p125
        $region42: #{tpu_custom_call.1} parent=39 // pred_check_branch
          %384 = sbr.rel (%p382) target = $region44
        $region43: #{tpu_custom_call.1} parent=39 // pred_region
          %s385 = sand.u32 %s110, 1
          %s386 = scalar_lea.sflag [#allocation3], %s385
          %s387 = sand.u32 %s110, 1
          %s388 = smul.addr %s387, 32
          %s389 = scalar_lea.vmem [#allocation2], %s388
          %390 = dma.done %s386, 512
        $region44: #{tpu_custom_call.1} parent=39 // pred_fallthru
          _
      $region40: #{tpu_custom_call.1} parent=5 // pred_fallthru
        _
    $region6: #{tpu_custom_call.1} parent=1 // loop_footer
      %s16 = sadd.s32 1, %s12
    $region7: #{tpu_custom_call.1} parent=1 // loop_footer_branch
      %11 = sbr.rel target = $region3
    $region8: #{tpu_custom_call.1} parent=1 // loop_exit
      _
    %391 = vsyncpa [#allocation3], 1
    %s392 = scalar_lea.sflag [#allocation3], 1
    %393 = vsyncpa %s392, 1

</llo_original>
